<compile_context>
chip_gen: v6e
topology: v6e:2x2x1
jax: 0.10.0
libtpu: 0.0.40
codegen_flags: <defaults>
</compile_context>

<pallas_src>
import jax
import jax.numpy as jnp
import numpy as np
from jax.experimental import pallas as pl
from jax.experimental.pallas import tpu as pltpu

MIN_DEG = 0
MAX_DEG = 5
SCALES = tuple(float(2 ** i) for i in range(MIN_DEG, MAX_DEG))  # (1, 2, 4, 8, 16)
NUM_SCALES = len(SCALES)
NUM_COMP = 2 * NUM_SCALES + 1  # 5 sin + 5 cos + identity = 11
LANES = 128


def _pe_kernel(x_ref, o_ref):
    """No-variance path. x_ref: (T, 128). o_ref: (NUM_COMP, T, 128)."""
    x = x_ref[...].astype(jnp.float32)
    for c, s in enumerate(SCALES):
        xs = x * s
        o_ref[c] = jnp.sin(xs).astype(o_ref.dtype)                 # full 128-lane vst
        o_ref[NUM_SCALES + c] = jnp.cos(xs).astype(o_ref.dtype)    # cos == sin(.+pi/2)
    o_ref[2 * NUM_SCALES] = x.astype(o_ref.dtype)


def _pe_kernel_y(x_ref, y_ref, o_ref):
    """Variance path: exp(-0.5 * s^2 * y) weighting of the sin/cos components."""
    x = x_ref[...].astype(jnp.float32)
    y = y_ref[...].astype(jnp.float32)

    # exp weights: s^2 quadruples per scale, so w(2s) = w(s)^4 (two squarings).
    # Keep a direct exp for the largest scale so accumulated rounding stays
    # comfortably below the ~1e-5 tolerance of the reference.
    w = jnp.exp(-0.5 * y)            # s = 1
    weights = [w]
    for _ in SCALES[1:-1]:           # s = 2, 4, 8
        w2 = w * w
        w = w2 * w2
        weights.append(w)
    weights.append(jnp.exp((-0.5 * SCALES[-1] * SCALES[-1]) * y))  # s = 16, direct

    for c, s in enumerate(SCALES):
        xs = x * s
        o_ref[c] = (weights[c] * jnp.sin(xs)).astype(o_ref.dtype)
        o_ref[NUM_SCALES + c] = (weights[c] * jnp.cos(xs)).astype(o_ref.dtype)
    o_ref[2 * NUM_SCALES] = x.astype(o_ref.dtype)


def _default_tile_rows():
    """512 rows on v5e/v6e (already ~roofline there); larger tiles on v7x."""
    try:
        kind = jax.devices()[0].device_kind.lower()
    except Exception:  # pragma: no cover - defensive
        return 512
    if "v7" in kind or "7x" in kind:
        return 2048
    return 512


def _choose_block_rows(r, tile_rows):
    """Pick a sublane-aligned block size with a balanced, even-ish grid."""
    tile_rows = max(8, (tile_rows // 8) * 8)
    if r < 32:
        return r  # single small block; equals the (padded) array dim.
    if r <= tile_rows:
        n_steps = 4  # keep a few steps so megacore parts can split the grid.
    else:
        n_steps = pl.cdiv(r, tile_rows)
        if n_steps % 2:
            n_steps += 1  # even step count -> both TensorCores get equal work.
    return max(8, pl.cdiv(pl.cdiv(r, n_steps), 8) * 8)


def _vmem_limit_bytes(block_rows, has_y, in_itemsize, out_itemsize):
    per_in = block_rows * LANES * in_itemsize * (2 if has_y else 1)
    per_out = NUM_COMP * block_rows * LANES * out_itemsize
    need = 2 * (per_in + per_out)  # double-buffered inputs and output
    return int(min(64 << 20, max(16 << 20, (need * 3) // 2)))


def positional_encoding(x, y=None, *, tile_rows=None, out_dtype=None,
                        component_major=False):
    """Pallas implementation of PositionalEncoding.forward (min_deg=0, max_deg=5).

    component_major=False (default): returns the module-faithful (..., 11*d)
      interleaved encoding.
    component_major=True: returns shape (NUM_COMP, *x.shape) with
      out[c, ..., dd] = component c of x[..., dd] — the kernel's native layout,
      with zero post-processing (preferred for performance).
    """
    orig_shape = x.shape
    d = orig_shape[-1]
    n = x.size // d
    out_dtype = np.dtype(x.dtype if out_dtype is None else out_dtype)
    if tile_rows is None:
        tile_rows = _default_tile_rows()

    # Lane-dense slab: flatten features into lanes (pure contiguous reshape).
    x_flat = x.reshape(-1)
    m = x_flat.shape[0]
    r = pl.cdiv(m, LANES)
    block_rows = _choose_block_rows(r, tile_rows)
    r_pad = pl.cdiv(r, block_rows) * block_rows
    m_pad = r_pad * LANES
    if m_pad != m:  # only ragged shapes pay the pad copy
        x_flat = jnp.pad(x_flat, (0, m_pad - m))
    x_slab = x_flat.reshape(r_pad, LANES)

    grid = (r_pad // block_rows,)
    in_spec = pl.BlockSpec((block_rows, LANES), lambda i: (i, 0))
    out_spec = pl.BlockSpec((NUM_COMP, block_rows, LANES), lambda i: (0, i, 0))
    out_shape = jax.ShapeDtypeStruct((NUM_COMP, r_pad, LANES), out_dtype)
    cparams = pltpu.CompilerParams(
        dimension_semantics=("parallel",),
        vmem_limit_bytes=_vmem_limit_bytes(
            block_rows, y is not None, np.dtype(x.dtype).itemsize,
            out_dtype.itemsize),
    )

    if y is None:
        out_k = pl.pallas_call(
            _pe_kernel,
            out_shape=out_shape,
            grid_spec=pl.GridSpec(grid=grid, in_specs=[in_spec], out_specs=out_spec),
            compiler_params=cparams,
        )(x_slab)
    else:
        y_flat = y.reshape(-1)
        if m_pad != m:
            y_flat = jnp.pad(y_flat, (0, m_pad - m))
        y_slab = y_flat.reshape(r_pad, LANES)
        out_k = pl.pallas_call(
            _pe_kernel_y,
            out_shape=out_shape,
            grid_spec=pl.GridSpec(grid=grid, in_specs=[in_spec, in_spec],
                                  out_specs=out_spec),
            compiler_params=cparams,
        )(x_slab, y_slab)

    out_flat = out_k.reshape(NUM_COMP, m_pad)
    if m_pad != m:
        out_flat = out_flat[:, :m]

    if component_major:
        # Native kernel layout: contiguous reshape only, no relayout at all.
        return out_flat.reshape(NUM_COMP, *orig_shape)

    # Module-faithful interleaved (..., NUM_COMP * d) layout.
    # TODO(synk): this transpose is one extra HBM round-trip of the 11x output;
    # prefer component_major=True when the consumer allows it.
    out = jnp.transpose(out_flat.reshape(NUM_COMP, n, d), (1, 0, 2))
    return out.reshape(*orig_shape[:-1], d * NUM_COMP)


def _reference(x, y=None):
    """Pure-JAX reference mirroring the PyTorch forward exactly."""
    scales = jnp.asarray(SCALES, dtype=x.dtype)
    shape = list(x.shape[:-1]) + [-1]
    x_enc = (x[..., None, :] * scales[:, None]).reshape(shape)
    x_enc = jnp.concatenate((x_enc, x_enc + 0.5 * jnp.pi), -1)
    if y is not None:
        y_enc = (y[..., None, :] * scales[:, None] ** 2).reshape(shape)
        y_enc = jnp.concatenate((y_enc, y_enc), -1)
        x_ret = jnp.exp(-0.5 * y_enc) * jnp.sin(x_enc)
        return jnp.concatenate((x_ret, x), -1)
    x_ret = jnp.sin(x_enc)
    return jnp.concatenate((x_ret, x), -1)


if __name__ == "__main__":
    key = jax.random.PRNGKey(0)
    kx, ky, kx2, ky2 = jax.random.split(key, 4)

    # Small NeRF-like coordinate batch (features-last), matching the module.
    x = jax.random.normal(kx, (2, 64, 4), dtype=jnp.float32)
    y = jax.random.uniform(ky, (2, 64, 4), dtype=jnp.float32)  # variances >= 0

    out = jax.block_until_ready(positional_encoding(x))
    out_y = jax.block_until_ready(positional_encoding(x, y))
    assert out.shape == (2, 64, 4 * NUM_COMP)
    assert jnp.allclose(out, _reference(x), atol=1e-5, rtol=1e-5)
    assert jnp.allclose(out_y, _reference(x, y), atol=1e-5, rtol=1e-5)

    # Reviewer-preferred component-major fast path (zero post-kernel relayout).
    out_cm = jax.block_until_ready(positional_encoding(x, component_major=True))
    ref_cm = jnp.moveaxis(_reference(x).reshape(2, 64, NUM_COMP, 4), -2, 0)
    assert out_cm.shape == (NUM_COMP, 2, 64, 4)
    assert jnp.allclose(out_cm, ref_cm, atol=1e-5, rtol=1e-5)

    # Multi-block path (grid > 1), D=3 coordinates, with and without variances.
    x3 = jax.random.normal(kx2, (4096, 3), dtype=jnp.float32)
    y3 = jax.random.uniform(ky2, (4096, 3), dtype=jnp.float32)
    out3 = jax.block_until_ready(positional_encoding(x3))
    out3_y = jax.block_until_ready(positional_encoding(x3, y3))
    assert out3.shape == (4096, 3 * NUM_COMP)
    assert jnp.allclose(out3, _reference(x3), atol=1e-5, rtol=1e-5)
    assert jnp.allclose(out3_y, _reference(x3, y3), atol=1e-5, rtol=1e-5)

    # Ragged shape exercising the pad/slice tail handling.
    xr = jax.random.normal(kx, (2, 50, 4), dtype=jnp.float32)
    outr = jax.block_until_ready(positional_encoding(xr))
    assert outr.shape == (2, 50, 4 * NUM_COMP)
    assert jnp.allclose(outr, _reference(xr), atol=1e-5, rtol=1e-5)

    print("KERNEL_OK")
</pallas_src>

<mosaic_0001>
module attributes {stable_mosaic.version = 11 : i64} {
  func.func @_pe_kernel(%arg0: i32, %arg1: memref<4x128xf32, #tpu.memory_space<vmem>>, %arg2: memref<11x4x128xf32, #tpu.memory_space<vmem>>) attributes {dimension_semantics = [#tpu.dimension_semantics<parallel>], iteration_bounds = array<i64: 1>, scalar_prefetch = 0 : i64, scratch_operands = 0 : i64, tpu.core_type = #tpu.core_type<tc>, window_params = [{transform_indices = @transform_0, window_bounds = array<i64: 4, 128>}, {transform_indices = @transform_1, window_bounds = array<i64: 11, 4, 128>}]} {
    %c0 = arith.constant 0 : index
    %c0_0 = arith.constant 0 : index
    %0 = vector.load %arg1[%c0, %c0_0] : memref<4x128xf32, #tpu.memory_space<vmem>>, vector<4x128xf32>
    %cst = arith.constant 1.000000e+00 : f32
    %1 = vector.broadcast %cst : f32 to vector<4x128xf32>
    %2 = arith.mulf %0, %1 : vector<4x128xf32>
    %3 = math.sin %2 : vector<4x128xf32>
    %c0_1 = arith.constant 0 : index
    %c0_2 = arith.constant 0 : index
    %c0_3 = arith.constant 0 : index
    %4 = vector.load %arg2[%c0_1, %c0_2, %c0_3] : memref<11x4x128xf32, #tpu.memory_space<vmem>>, vector<1x4x128xf32>
    %5 = vector.shape_cast %4 : vector<1x4x128xf32> to vector<4x128xf32>
    %6 = vector.shape_cast %3 : vector<4x128xf32> to vector<1x4x128xf32>
    tpu.vector_store %arg2[%c0_1, %c0_2, %c0_3], %6 {strides = array<i32>} : memref<11x4x128xf32, #tpu.memory_space<vmem>>, vector<1x4x128xf32>,
    %7 = math.cos %2 : vector<4x128xf32>
    %c5 = arith.constant 5 : index
    %c0_4 = arith.constant 0 : index
    %c0_5 = arith.constant 0 : index
    %8 = vector.load %arg2[%c5, %c0_4, %c0_5] : memref<11x4x128xf32, #tpu.memory_space<vmem>>, vector<1x4x128xf32>
    %9 = vector.shape_cast %8 : vector<1x4x128xf32> to vector<4x128xf32>
    %10 = vector.shape_cast %7 : vector<4x128xf32> to vector<1x4x128xf32>
    tpu.vector_store %arg2[%c5, %c0_4, %c0_5], %10 {strides = array<i32>} : memref<11x4x128xf32, #tpu.memory_space<vmem>>, vector<1x4x128xf32>,
    %cst_6 = arith.constant 2.000000e+00 : f32
    %11 = vector.broadcast %cst_6 : f32 to vector<4x128xf32>
    %12 = arith.mulf %0, %11 : vector<4x128xf32>
    %13 = math.sin %12 : vector<4x128xf32>
    %c1 = arith.constant 1 : index
    %c0_7 = arith.constant 0 : index
    %c0_8 = arith.constant 0 : index
    %14 = vector.load %arg2[%c1, %c0_7, %c0_8] : memref<11x4x128xf32, #tpu.memory_space<vmem>>, vector<1x4x128xf32>
    %15 = vector.shape_cast %14 : vector<1x4x128xf32> to vector<4x128xf32>
    %16 = vector.shape_cast %13 : vector<4x128xf32> to vector<1x4x128xf32>
    tpu.vector_store %arg2[%c1, %c0_7, %c0_8], %16 {strides = array<i32>} : memref<11x4x128xf32, #tpu.memory_space<vmem>>, vector<1x4x128xf32>,
    %17 = math.cos %12 : vector<4x128xf32>
    %c6 = arith.constant 6 : index
    %c0_9 = arith.constant 0 : index
    %c0_10 = arith.constant 0 : index
    %18 = vector.load %arg2[%c6, %c0_9, %c0_10] : memref<11x4x128xf32, #tpu.memory_space<vmem>>, vector<1x4x128xf32>
    %19 = vector.shape_cast %18 : vector<1x4x128xf32> to vector<4x128xf32>
    %20 = vector.shape_cast %17 : vector<4x128xf32> to vector<1x4x128xf32>
    tpu.vector_store %arg2[%c6, %c0_9, %c0_10], %20 {strides = array<i32>} : memref<11x4x128xf32, #tpu.memory_space<vmem>>, vector<1x4x128xf32>,
    %cst_11 = arith.constant 4.000000e+00 : f32
    %21 = vector.broadcast %cst_11 : f32 to vector<4x128xf32>
    %22 = arith.mulf %0, %21 : vector<4x128xf32>
    %23 = math.sin %22 : vector<4x128xf32>
    %c2 = arith.constant 2 : index
    %c0_12 = arith.constant 0 : index
    %c0_13 = arith.constant 0 : index
    %24 = vector.load %arg2[%c2, %c0_12, %c0_13] : memref<11x4x128xf32, #tpu.memory_space<vmem>>, vector<1x4x128xf32>
    %25 = vector.shape_cast %24 : vector<1x4x128xf32> to vector<4x128xf32>
    %26 = vector.shape_cast %23 : vector<4x128xf32> to vector<1x4x128xf32>
    tpu.vector_store %arg2[%c2, %c0_12, %c0_13], %26 {strides = array<i32>} : memref<11x4x128xf32, #tpu.memory_space<vmem>>, vector<1x4x128xf32>,
    %27 = math.cos %22 : vector<4x128xf32>
    %c7 = arith.constant 7 : index
    %c0_14 = arith.constant 0 : index
    %c0_15 = arith.constant 0 : index
    %28 = vector.load %arg2[%c7, %c0_14, %c0_15] : memref<11x4x128xf32, #tpu.memory_space<vmem>>, vector<1x4x128xf32>
    %29 = vector.shape_cast %28 : vector<1x4x128xf32> to vector<4x128xf32>
    %30 = vector.shape_cast %27 : vector<4x128xf32> to vector<1x4x128xf32>
    tpu.vector_store %arg2[%c7, %c0_14, %c0_15], %30 {strides = array<i32>} : memref<11x4x128xf32, #tpu.memory_space<vmem>>, vector<1x4x128xf32>,
    %cst_16 = arith.constant 8.000000e+00 : f32
    %31 = vector.broadcast %cst_16 : f32 to vector<4x128xf32>
    %32 = arith.mulf %0, %31 : vector<4x128xf32>
    %33 = math.sin %32 : vector<4x128xf32>
    %c3 = arith.constant 3 : index
    %c0_17 = arith.constant 0 : index
    %c0_18 = arith.constant 0 : index
    %34 = vector.load %arg2[%c3, %c0_17, %c0_18] : memref<11x4x128xf32, #tpu.memory_space<vmem>>, vector<1x4x128xf32>
    %35 = vector.shape_cast %34 : vector<1x4x128xf32> to vector<4x128xf32>
    %36 = vector.shape_cast %33 : vector<4x128xf32> to vector<1x4x128xf32>
    tpu.vector_store %arg2[%c3, %c0_17, %c0_18], %36 {strides = array<i32>} : memref<11x4x128xf32, #tpu.memory_space<vmem>>, vector<1x4x128xf32>,
    %37 = math.cos %32 : vector<4x128xf32>
    %c8 = arith.constant 8 : index
    %c0_19 = arith.constant 0 : index
    %c0_20 = arith.constant 0 : index
    %38 = vector.load %arg2[%c8, %c0_19, %c0_20] : memref<11x4x128xf32, #tpu.memory_space<vmem>>, vector<1x4x128xf32>
    %39 = vector.shape_cast %38 : vector<1x4x128xf32> to vector<4x128xf32>
    %40 = vector.shape_cast %37 : vector<4x128xf32> to vector<1x4x128xf32>
    tpu.vector_store %arg2[%c8, %c0_19, %c0_20], %40 {strides = array<i32>} : memref<11x4x128xf32, #tpu.memory_space<vmem>>, vector<1x4x128xf32>,
    %cst_21 = arith.constant 1.600000e+01 : f32
    %41 = vector.broadcast %cst_21 : f32 to vector<4x128xf32>
    %42 = arith.mulf %0, %41 : vector<4x128xf32>
    %43 = math.sin %42 : vector<4x128xf32>
    %c4 = arith.constant 4 : index
    %c0_22 = arith.constant 0 : index
    %c0_23 = arith.constant 0 : index
    %44 = vector.load %arg2[%c4, %c0_22, %c0_23] : memref<11x4x128xf32, #tpu.memory_space<vmem>>, vector<1x4x128xf32>
    %45 = vector.shape_cast %44 : vector<1x4x128xf32> to vector<4x128xf32>
    %46 = vector.shape_cast %43 : vector<4x128xf32> to vector<1x4x128xf32>
    tpu.vector_store %arg2[%c4, %c0_22, %c0_23], %46 {strides = array<i32>} : memref<11x4x128xf32, #tpu.memory_space<vmem>>, vector<1x4x128xf32>,
    %47 = math.cos %42 : vector<4x128xf32>
    %c9 = arith.constant 9 : index
    %c0_24 = arith.constant 0 : index
    %c0_25 = arith.constant 0 : index
    %48 = vector.load %arg2[%c9, %c0_24, %c0_25] : memref<11x4x128xf32, #tpu.memory_space<vmem>>, vector<1x4x128xf32>
    %49 = vector.shape_cast %48 : vector<1x4x128xf32> to vector<4x128xf32>
    %50 = vector.shape_cast %47 : vector<4x128xf32> to vector<1x4x128xf32>
    tpu.vector_store %arg2[%c9, %c0_24, %c0_25], %50 {strides = array<i32>} : memref<11x4x128xf32, #tpu.memory_space<vmem>>, vector<1x4x128xf32>,
    %c10 = arith.constant 10 : index
    %c0_26 = arith.constant 0 : index
    %c0_27 = arith.constant 0 : index
    %51 = vector.load %arg2[%c10, %c0_26, %c0_27] : memref<11x4x128xf32, #tpu.memory_space<vmem>>, vector<1x4x128xf32>
    %52 = vector.shape_cast %51 : vector<1x4x128xf32> to vector<4x128xf32>
    %53 = vector.shape_cast %0 : vector<4x128xf32> to vector<1x4x128xf32>
    tpu.vector_store %arg2[%c10, %c0_26, %c0_27], %53 {strides = array<i32>} : memref<11x4x128xf32, #tpu.memory_space<vmem>>, vector<1x4x128xf32>,
    return
  }
  func.func @transform_0(%arg0: i32) -> (i32, i32) {
    %c0_i32 = arith.constant 0 : i32
    %c0_i32_0 = arith.constant 0 : i32
    return %arg0, %c0_i32 : i32, i32
  }
  func.func @transform_1(%arg0: i32) -> (i32, i32, i32) {
    %c0_i32 = arith.constant 0 : i32
    %c0_i32_0 = arith.constant 0 : i32
    %c0_i32_1 = arith.constant 0 : i32
    return %c0_i32, %arg0, %c0_i32_0 : i32, i32, i32
  }
}

</mosaic_0001>

<llo_original>
// kernel: tpu_custom_call.1
$region0: #{tpu_custom_call.1}
  #allocation0 [shape = 'u32[]', space=smem, size = 0x4, offset = 0x4, fixed_abs, tag = 'smem constant byte address 0x4 - core index']
  #allocation1 [shape = 'u32[144,128]{1,0:T(1,128)}', space=vmem, size = 0x12000, scoped, tag = 'internal scratch']
  %s0 = inlined_call_operand.hbm [shape: f32[4,128], index: 0, kind: input, shape index: {}]
  %s1 = inlined_call_operand.hbm [shape: f32[11,4,128], index: 1, kind: output, shape index: {}]
  %s2 = sld [smem:[#allocation0]]
  $region18: #{tpu_custom_call.1} parent=0
    _
  %s4 = ssub.s32 1, %s2
  %s5 = scalar_select 0, %s4, %s2
  $region1: #{tpu_custom_call.1} parent=0
    #allocation2 [shape = 'u8[2048]{0}', space=vmem, size = 0x800, scoped, tag = 'input window, operand 0, single buffered']
    #allocation3 [shape = 's32[1]{0}', space=sflag, size = 0x4, scoped, tag = 'scoped memory for tpu_custom_call.1']
    #allocation4 [shape = 's32[1]{0}', space=sflag, size = 0x4, scoped, tag = 'scoped memory for tpu_custom_call.1']
    #allocation5 [shape = 'u8[22528]{0}', space=vmem, size = 0x5800, scoped, tag = 'output window, operand 0, single buffered']
    %6 = vsyncpa [#allocation3], 0
    %7 = vsyncpa [#allocation4], 0
    // Predicated region
    $region2: #{tpu_custom_call.1} parent=1 // pred_check
      _
    $region3: #{tpu_custom_call.1} parent=1 // pred_check_branch
      %9 = sbr.rel (0) target = $region5
    $region4: #{tpu_custom_call.1} parent=1 // pred_region
      %s11 = ssub.s32 64, 64
      %12 = vsyncadd [#allocation3], %s11
      %s14 = sshll.u32 [#allocation2], 4
      %s15 = int_to_ptr.vmem [resolvable:$true] %s14
      %17 = dma.hbm_to_vmem [thread:$0]  %s0, 64, %s15, [#allocation3]
    $region5: #{tpu_custom_call.1} parent=1 // pred_fallthru
      _
    // Predicated region
    $region6: #{tpu_custom_call.1} parent=1 // pred_check
      _
    $region7: #{tpu_custom_call.1} parent=1 // pred_check_branch
      %19 = sbr.rel (0) target = $region9
    $region8: #{tpu_custom_call.1} parent=1 // pred_region
      %20 = dma.done [#allocation3], 64
    $region9: #{tpu_custom_call.1} parent=1 // pred_fallthru
      _
    %v21 = vld [vmem:[#allocation2] sm:$0xf]
    %v22 = vand.u32 2147483647, %v21
    %vm23 = vcmp.le.f32.partialorder %v22, 0.7853982
    %vm24 = vcmp.lt.s32.totalorder %v21, 0
    %v25 = vand.u32 %v21, 2139095040
    %v26 = vshrl.u32 %v25, 23
    %v27 = vsub.s32 %v26, 127
    %v28 = vand.u32 2147483647, %v21
    %v29 = vand.u32 %v28, 8388607
    %v30 = vor.u32 %v29, 8388608
    %v31 = vsub.s32 0, %v30
    %v32 = vadd.s32 %v27, 1
    %vm33 = vcmp.gt.s32.totalorder %v32, 0
    %v34 = vsel %vm33, %v32, 0
    %v35 = vshrl.u32 %v34, 5
    %v36 = vand.u32 %v34, 31
    %v37 = vsub.s32 32, %v36
    %v38 = vshrl.u32 683565275, %v37
    %v39 = vshll.u32 683565275, %v36
    %v40 = vshrl.u32 2475754826, %v37
    %v41 = vor.u32 %v39, %v40
    %v42 = vshll.u32 2475754826, %v36
    %v43 = vshrl.u32 2131351028, %v37
    %v44 = vor.u32 %v42, %v43
    %v45 = vshll.u32 2131351028, %v36
    %v46 = vshrl.u32 2102212464, %v37
    %v47 = vor.u32 %v45, %v46
    %v48 = vshll.u32 2102212464, %v36
    %v49 = vshrl.u32 920167782, %v37
    %v50 = vor.u32 %v48, %v49
    %v51 = vshll.u32 920167782, %v36
    %v52 = vshrl.u32 1326507024, %v37
    %v53 = vor.u32 %v51, %v52
    %vm54 = vcmp.lt.s32.totalorder %v35, 1
    %vm55 = vcmp.lt.s32.totalorder %v35, 2
    %vm56 = vcmp.lt.s32.totalorder %v35, 3
    %vm57 = vcmp.lt.s32.totalorder %v35, 4
    %v58 = vsel %vm54, %v38, %v41
    %v59 = vsel %vm57, %v47, 2102212464
    %v60 = vsel %vm56, %v44, %v59
    %v61 = vsel %vm55, %v58, %v60
    %v62 = vsel %vm54, %v41, %v44
    %v63 = vsel %vm57, %v50, 920167782
    %v64 = vsel %vm56, %v47, %v63
    %v65 = vsel %vm55, %v62, %v64
    %v66 = vsel %vm54, %v44, %v47
    %v67 = vsel %vm57, %v53, 1326507024
    %v68 = vsel %vm56, %v50, %v67
    %v69 = vsel %vm55, %v66, %v68
    %v70 = vshll.u32 %v30, 8
    %v71 = vmul.u32.u64.compose %v70, %v69
    %v72 = vextract.low.u32 %v71
    %v73 = vextract.high.u32 %v71
    %v74 = vmul.u32.u64.compose %v70, %v65
    %v75 = vextract.low.u32 %v74
    %v76 = vextract.high.u32 %v74
    %v77 = vmul.u32 %v70, %v61
    %v78 = vadd.s32 %v73, %v75
    %vm79 = vc.u32 %v73, %v75
    %v80 = vadd.s32 %v76, 1
    %v81 = vsel %vm79, %v80, %v76
    %v82 = vadd.s32 %v77, %v81
    %v83 = vadd.s32 %v82, 536870912
    %v84 = vshrl.u32 %v83, 30
    %v85 = vshll.u32 %v84, 30
    %v86 = vsub.s32 %v82, %v85
    %vm87 = vcmp.lt.s32.totalorder %v86, 0
    %v88 = vsub.s32 0, %v86
    %v89 = vsel %vm87, %v88, %v86
    %v90 = vclz %v89
    %v91 = vsub.s32 %v90, 2
    %vm92 = vcmp.gt.s32.totalorder 0, %v91
    %v93 = vsel %vm92, 0, %v91
    %v94 = vsub.s32 32, %v93
    %v95 = vshll.u32 %v86, %v93
    %v96 = vshrl.u32 %v78, %v94
    %v97 = vor.u32 %v95, %v96
    %v98 = vsub.s32 4294967266, %v93
    %v99 = vadd.s32 %v98, 127
    %v100 = vshll.u32 %v99, 23
    %v101 = vor.u32 4788187, %v100
    %v102 = vand.u32 2147483647, %v101
    %v104 = vcvt.s32.f32 %v97
    %v105 = vmul.f32 %v104, %v102
    %v106 = vxor.u32 %v105, 2147483648
    %v107 = vsel %vm24, %v106, %v105
    %v108 = vsub.s32 4, %v84
    %v109 = vsel %vm24, %v108, %v84
    %v110 = vsel %vm23, %v21, %v107
    %v111 = vsel %vm23, 0, %v109
    %v112 = vcosq.f32.pop %v110
    %v113 = vsinq.f32.pop %v110
    %vm114 = vweird.f32 %v21
    %v115 = vadd.s32 %v111, 3
    %v116 = vand.u32 %v115, 3
    %vm117 = vcmp.lt.s32.totalorder %v116, 2
    %vm118 = vcmp.eq.s32.totalorder %v116, 0
    %v119 = vxor.u32 %v113, 2147483648
    %v120 = vsel %vm118, %v112, %v119
    %vm121 = vcmp.eq.s32.totalorder %v116, 2
    %v122 = vxor.u32 %v112, 2147483648
    %v123 = vsel %vm121, %v122, %v113
    %v124 = vsel %vm117, %v120, %v123
    %v125 = vsel %vm114, nan, %v124
    %126 = vst [vmem:[#allocation5] sm:$0xf] %v125
    %v127 = vand.u32 2147483647, %v21
    %vm128 = vcmp.le.f32.partialorder %v127, 0.7853982
    %vm129 = vcmp.lt.s32.totalorder %v21, 0
    %v130 = vand.u32 %v21, 2139095040
    %v131 = vshrl.u32 %v130, 23
    %v132 = vsub.s32 %v131, 127
    %v133 = vand.u32 2147483647, %v21
    %v134 = vand.u32 %v133, 8388607
    %v135 = vor.u32 %v134, 8388608
    %v136 = vsub.s32 0, %v135
    %v137 = vadd.s32 %v132, 1
    %vm138 = vcmp.gt.s32.totalorder %v137, 0
    %v139 = vsel %vm138, %v137, 0
    %v140 = vshrl.u32 %v139, 5
    %v141 = vand.u32 %v139, 31
    %v142 = vsub.s32 32, %v141
    %v143 = vshrl.u32 683565275, %v142
    %v144 = vshll.u32 683565275, %v141
    %v145 = vshrl.u32 2475754826, %v142
    %v146 = vor.u32 %v144, %v145
    %v147 = vshll.u32 2475754826, %v141
    %v148 = vshrl.u32 2131351028, %v142
    %v149 = vor.u32 %v147, %v148
    %v150 = vshll.u32 2131351028, %v141
    %v151 = vshrl.u32 2102212464, %v142
    %v152 = vor.u32 %v150, %v151
    %v153 = vshll.u32 2102212464, %v141
    %v154 = vshrl.u32 920167782, %v142
    %v155 = vor.u32 %v153, %v154
    %v156 = vshll.u32 920167782, %v141
    %v157 = vshrl.u32 1326507024, %v142
    %v158 = vor.u32 %v156, %v157
    %vm159 = vcmp.lt.s32.totalorder %v140, 1
    %vm160 = vcmp.lt.s32.totalorder %v140, 2
    %vm161 = vcmp.lt.s32.totalorder %v140, 3
    %vm162 = vcmp.lt.s32.totalorder %v140, 4
    %v163 = vsel %vm159, %v143, %v146
    %v164 = vsel %vm162, %v152, 2102212464
    %v165 = vsel %vm161, %v149, %v164
    %v166 = vsel %vm160, %v163, %v165
    %v167 = vsel %vm159, %v146, %v149
    %v168 = vsel %vm162, %v155, 920167782
    %v169 = vsel %vm161, %v152, %v168
    %v170 = vsel %vm160, %v167, %v169
    %v171 = vsel %vm159, %v149, %v152
    %v172 = vsel %vm162, %v158, 1326507024
    %v173 = vsel %vm161, %v155, %v172
    %v174 = vsel %vm160, %v171, %v173
    %v175 = vshll.u32 %v135, 8
    %v176 = vmul.u32.u64.compose %v175, %v174
    %v177 = vextract.low.u32 %v176
    %v178 = vextract.high.u32 %v176
    %v179 = vmul.u32.u64.compose %v175, %v170
    %v180 = vextract.low.u32 %v179
    %v181 = vextract.high.u32 %v179
    %v182 = vmul.u32 %v175, %v166
    %v183 = vadd.s32 %v178, %v180
    %vm184 = vc.u32 %v178, %v180
    %v185 = vadd.s32 %v181, 1
    %v186 = vsel %vm184, %v185, %v181
    %v187 = vadd.s32 %v182, %v186
    %v188 = vadd.s32 %v187, 536870912
    %v189 = vshrl.u32 %v188, 30
    %v190 = vshll.u32 %v189, 30
    %v191 = vsub.s32 %v187, %v190
    %vm192 = vcmp.lt.s32.totalorder %v191, 0
    %v193 = vsub.s32 0, %v191
    %v194 = vsel %vm192, %v193, %v191
    %v195 = vclz %v194
    %v196 = vsub.s32 %v195, 2
    %vm197 = vcmp.gt.s32.totalorder 0, %v196
    %v198 = vsel %vm197, 0, %v196
    %v199 = vsub.s32 32, %v198
    %v200 = vshll.u32 %v191, %v198
    %v201 = vshrl.u32 %v183, %v199
    %v202 = vor.u32 %v200, %v201
    %v203 = vsub.s32 4294967266, %v198
    %v204 = vadd.s32 %v203, 127
    %v205 = vshll.u32 %v204, 23
    %v206 = vor.u32 4788187, %v205
    %v207 = vand.u32 2147483647, %v206
    %v209 = vcvt.s32.f32 %v202
    %v210 = vmul.f32 %v209, %v207
    %v211 = vxor.u32 %v210, 2147483648
    %v212 = vsel %vm129, %v211, %v210
    %v213 = vsub.s32 4, %v189
    %v214 = vsel %vm129, %v213, %v189
    %v215 = vsel %vm128, %v21, %v212
    %v216 = vsel %vm128, 0, %v214
    %v217 = vcosq.f32.pop %v215
    %v218 = vsinq.f32.pop %v215
    %vm219 = vweird.f32 %v21
    %v220 = vand.u32 %v216, 3
    %vm221 = vcmp.lt.s32.totalorder %v220, 2
    %vm222 = vcmp.eq.s32.totalorder %v220, 0
    %v223 = vxor.u32 %v218, 2147483648
    %v224 = vsel %vm222, %v217, %v223
    %vm225 = vcmp.eq.s32.totalorder %v220, 2
    %v226 = vxor.u32 %v217, 2147483648
    %v227 = vsel %vm225, %v226, %v218
    %v228 = vsel %vm221, %v224, %v227
    %v229 = vsel %vm219, nan, %v228
    %s230 = scalar_lea.vmem [#allocation5], 20
    %231 = vst [vmem:[%s230] sm:$0xf] %v229
    %v232 = vmul.f32 %v21, 2.0
    %v233 = vand.u32 2147483647, %v232
    %vm234 = vcmp.le.f32.partialorder %v233, 0.7853982
    %vm235 = vcmp.lt.s32.totalorder %v232, 0
    %v236 = vand.u32 %v232, 2139095040
    %v237 = vshrl.u32 %v236, 23
    %v238 = vsub.s32 %v237, 127
    %v239 = vand.u32 2147483647, %v232
    %v240 = vand.u32 %v239, 8388607
    %v241 = vor.u32 %v240, 8388608
    %v242 = vsub.s32 0, %v241
    %v243 = vadd.s32 %v238, 1
    %vm244 = vcmp.gt.s32.totalorder %v243, 0
    %v245 = vsel %vm244, %v243, 0
    %v246 = vshrl.u32 %v245, 5
    %v247 = vand.u32 %v245, 31
    %v248 = vsub.s32 32, %v247
    %v249 = vshrl.u32 683565275, %v248
    %v250 = vshll.u32 683565275, %v247
    %v251 = vshrl.u32 2475754826, %v248
    %v252 = vor.u32 %v250, %v251
    %v253 = vshll.u32 2475754826, %v247
    %v254 = vshrl.u32 2131351028, %v248
    %v255 = vor.u32 %v253, %v254
    %v256 = vshll.u32 2131351028, %v247
    %v257 = vshrl.u32 2102212464, %v248
    %v258 = vor.u32 %v256, %v257
    %v259 = vshll.u32 2102212464, %v247
    %v260 = vshrl.u32 920167782, %v248
    %v261 = vor.u32 %v259, %v260
    %v262 = vshll.u32 920167782, %v247
    %v263 = vshrl.u32 1326507024, %v248
    %v264 = vor.u32 %v262, %v263
    %vm265 = vcmp.lt.s32.totalorder %v246, 1
    %vm266 = vcmp.lt.s32.totalorder %v246, 2
    %vm267 = vcmp.lt.s32.totalorder %v246, 3
    %vm268 = vcmp.lt.s32.totalorder %v246, 4
    %v269 = vsel %vm265, %v249, %v252
    %v270 = vsel %vm268, %v258, 2102212464
    %v271 = vsel %vm267, %v255, %v270
    %v272 = vsel %vm266, %v269, %v271
    %v273 = vsel %vm265, %v252, %v255
    %v274 = vsel %vm268, %v261, 920167782
    %v275 = vsel %vm267, %v258, %v274
    %v276 = vsel %vm266, %v273, %v275
    %v277 = vsel %vm265, %v255, %v258
    %v278 = vsel %vm268, %v264, 1326507024
    %v279 = vsel %vm267, %v261, %v278
    %v280 = vsel %vm266, %v277, %v279
    %v281 = vshll.u32 %v241, 8
    %v282 = vmul.u32.u64.compose %v281, %v280
    %v283 = vextract.low.u32 %v282
    %v284 = vextract.high.u32 %v282
    %v285 = vmul.u32.u64.compose %v281, %v276
    %v286 = vextract.low.u32 %v285
    %v287 = vextract.high.u32 %v285
    %v288 = vmul.u32 %v281, %v272
    %v289 = vadd.s32 %v284, %v286
    %vm290 = vc.u32 %v284, %v286
    %v291 = vadd.s32 %v287, 1
    %v292 = vsel %vm290, %v291, %v287
    %v293 = vadd.s32 %v288, %v292
    %v294 = vadd.s32 %v293, 536870912
    %v295 = vshrl.u32 %v294, 30
    %v296 = vshll.u32 %v295, 30
    %v297 = vsub.s32 %v293, %v296
    %vm298 = vcmp.lt.s32.totalorder %v297, 0
    %v299 = vsub.s32 0, %v297
    %v300 = vsel %vm298, %v299, %v297
    %v301 = vclz %v300
    %v302 = vsub.s32 %v301, 2
    %vm303 = vcmp.gt.s32.totalorder 0, %v302
    %v304 = vsel %vm303, 0, %v302
    %v305 = vsub.s32 32, %v304
    %v306 = vshll.u32 %v297, %v304
    %v307 = vshrl.u32 %v289, %v305
    %v308 = vor.u32 %v306, %v307
    %v309 = vsub.s32 4294967266, %v304
    %v310 = vadd.s32 %v309, 127
    %v311 = vshll.u32 %v310, 23
    %v312 = vor.u32 4788187, %v311
    %v313 = vand.u32 2147483647, %v312
    %v315 = vcvt.s32.f32 %v308
    %v316 = vmul.f32 %v315, %v313
    %v317 = vxor.u32 %v316, 2147483648
    %v318 = vsel %vm235, %v317, %v316
    %v319 = vsub.s32 4, %v295
    %v320 = vsel %vm235, %v319, %v295
    %v321 = vsel %vm234, %v232, %v318
    %v322 = vsel %vm234, 0, %v320
    %v323 = vcosq.f32.pop %v321
    %v324 = vsinq.f32.pop %v321
    %vm325 = vweird.f32 %v232
    %v326 = vadd.s32 %v322, 3
    %v327 = vand.u32 %v326, 3
    %vm328 = vcmp.lt.s32.totalorder %v327, 2
    %vm329 = vcmp.eq.s32.totalorder %v327, 0
    %v330 = vxor.u32 %v324, 2147483648
    %v331 = vsel %vm329, %v323, %v330
    %vm332 = vcmp.eq.s32.totalorder %v327, 2
    %v333 = vxor.u32 %v323, 2147483648
    %v334 = vsel %vm332, %v333, %v324
    %v335 = vsel %vm328, %v331, %v334
    %v336 = vsel %vm325, nan, %v335
    %s337 = scalar_lea.vmem [#allocation5], 4
    %338 = vst [vmem:[%s337] sm:$0xf] %v336
    %v339 = vand.u32 2147483647, %v232
    %vm340 = vcmp.le.f32.partialorder %v339, 0.7853982
    %vm341 = vcmp.lt.s32.totalorder %v232, 0
    %v342 = vand.u32 %v232, 2139095040
    %v343 = vshrl.u32 %v342, 23
    %v344 = vsub.s32 %v343, 127
    %v345 = vand.u32 2147483647, %v232
    %v346 = vand.u32 %v345, 8388607
    %v347 = vor.u32 %v346, 8388608
    %v348 = vsub.s32 0, %v347
    %v349 = vadd.s32 %v344, 1
    %vm350 = vcmp.gt.s32.totalorder %v349, 0
    %v351 = vsel %vm350, %v349, 0
    %v352 = vshrl.u32 %v351, 5
    %v353 = vand.u32 %v351, 31
    %v354 = vsub.s32 32, %v353
    %v355 = vshrl.u32 683565275, %v354
    %v356 = vshll.u32 683565275, %v353
    %v357 = vshrl.u32 2475754826, %v354
    %v358 = vor.u32 %v356, %v357
    %v359 = vshll.u32 2475754826, %v353
    %v360 = vshrl.u32 2131351028, %v354
    %v361 = vor.u32 %v359, %v360
    %v362 = vshll.u32 2131351028, %v353
    %v363 = vshrl.u32 2102212464, %v354
    %v364 = vor.u32 %v362, %v363
    %v365 = vshll.u32 2102212464, %v353
    %v366 = vshrl.u32 920167782, %v354
    %v367 = vor.u32 %v365, %v366
    %v368 = vshll.u32 920167782, %v353
    %v369 = vshrl.u32 1326507024, %v354
    %v370 = vor.u32 %v368, %v369
    %vm371 = vcmp.lt.s32.totalorder %v352, 1
    %vm372 = vcmp.lt.s32.totalorder %v352, 2
    %vm373 = vcmp.lt.s32.totalorder %v352, 3
    %vm374 = vcmp.lt.s32.totalorder %v352, 4
    %v375 = vsel %vm371, %v355, %v358
    %v376 = vsel %vm374, %v364, 2102212464
    %v377 = vsel %vm373, %v361, %v376
    %v378 = vsel %vm372, %v375, %v377
    %v379 = vsel %vm371, %v358, %v361
    %v380 = vsel %vm374, %v367, 920167782
    %v381 = vsel %vm373, %v364, %v380
    %v382 = vsel %vm372, %v379, %v381
    %v383 = vsel %vm371, %v361, %v364
    %v384 = vsel %vm374, %v370, 1326507024
    %v385 = vsel %vm373, %v367, %v384
    %v386 = vsel %vm372, %v383, %v385
    %v387 = vshll.u32 %v347, 8
    %v388 = vmul.u32.u64.compose %v387, %v386
    %v389 = vextract.low.u32 %v388
    %v390 = vextract.high.u32 %v388
    %v391 = vmul.u32.u64.compose %v387, %v382
    %v392 = vextract.low.u32 %v391
    %v393 = vextract.high.u32 %v391
    %v394 = vmul.u32 %v387, %v378
    %v395 = vadd.s32 %v390, %v392
    %vm396 = vc.u32 %v390, %v392
    %v397 = vadd.s32 %v393, 1
    %v398 = vsel %vm396, %v397, %v393
    %v399 = vadd.s32 %v394, %v398
    %v400 = vadd.s32 %v399, 536870912
    %v401 = vshrl.u32 %v400, 30
    %v402 = vshll.u32 %v401, 30
    %v403 = vsub.s32 %v399, %v402
    %vm404 = vcmp.lt.s32.totalorder %v403, 0
    %v405 = vsub.s32 0, %v403
    %v406 = vsel %vm404, %v405, %v403
    %v407 = vclz %v406
    %v408 = vsub.s32 %v407, 2
    %vm409 = vcmp.gt.s32.totalorder 0, %v408
    %v410 = vsel %vm409, 0, %v408
    %v411 = vsub.s32 32, %v410
    %v412 = vshll.u32 %v403, %v410
    %v413 = vshrl.u32 %v395, %v411
    %v414 = vor.u32 %v412, %v413
    %v415 = vsub.s32 4294967266, %v410
    %v416 = vadd.s32 %v415, 127
    %v417 = vshll.u32 %v416, 23
    %v418 = vor.u32 4788187, %v417
    %v419 = vand.u32 2147483647, %v418
    %v421 = vcvt.s32.f32 %v414
    %v422 = vmul.f32 %v421, %v419
    %v423 = vxor.u32 %v422, 2147483648
    %v424 = vsel %vm341, %v423, %v422
    %v425 = vsub.s32 4, %v401
    %v426 = vsel %vm341, %v425, %v401
    %v427 = vsel %vm340, %v232, %v424
    %v428 = vsel %vm340, 0, %v426
    %v429 = vcosq.f32.pop %v427
    %v430 = vsinq.f32.pop %v427
    %vm431 = vweird.f32 %v232
    %v432 = vand.u32 %v428, 3
    %vm433 = vcmp.lt.s32.totalorder %v432, 2
    %vm434 = vcmp.eq.s32.totalorder %v432, 0
    %v435 = vxor.u32 %v430, 2147483648
    %v436 = vsel %vm434, %v429, %v435
    %vm437 = vcmp.eq.s32.totalorder %v432, 2
    %v438 = vxor.u32 %v429, 2147483648
    %v439 = vsel %vm437, %v438, %v430
    %v440 = vsel %vm433, %v436, %v439
    %v441 = vsel %vm431, nan, %v440
    %s442 = scalar_lea.vmem [#allocation5], 24
    %443 = vst [vmem:[%s442] sm:$0xf] %v441
    %v444 = vmul.f32 %v21, 4.0
    %v445 = vand.u32 2147483647, %v444
    %vm446 = vcmp.le.f32.partialorder %v445, 0.7853982
    %vm447 = vcmp.lt.s32.totalorder %v444, 0
    %v448 = vand.u32 %v444, 2139095040
    %v449 = vshrl.u32 %v448, 23
    %v450 = vsub.s32 %v449, 127
    %v451 = vand.u32 2147483647, %v444
    %v452 = vand.u32 %v451, 8388607
    %v453 = vor.u32 %v452, 8388608
    %v454 = vsub.s32 0, %v453
    %v455 = vadd.s32 %v450, 1
    %vm456 = vcmp.gt.s32.totalorder %v455, 0
    %v457 = vsel %vm456, %v455, 0
    %v458 = vshrl.u32 %v457, 5
    %v459 = vand.u32 %v457, 31
    %v460 = vsub.s32 32, %v459
    %v461 = vshrl.u32 683565275, %v460
    %v462 = vshll.u32 683565275, %v459
    %v463 = vshrl.u32 2475754826, %v460
    %v464 = vor.u32 %v462, %v463
    %v465 = vshll.u32 2475754826, %v459
    %v466 = vshrl.u32 2131351028, %v460
    %v467 = vor.u32 %v465, %v466
    %v468 = vshll.u32 2131351028, %v459
    %v469 = vshrl.u32 2102212464, %v460
    %v470 = vor.u32 %v468, %v469
    %v471 = vshll.u32 2102212464, %v459
    %v472 = vshrl.u32 920167782, %v460
    %v473 = vor.u32 %v471, %v472
    %v474 = vshll.u32 920167782, %v459
    %v475 = vshrl.u32 1326507024, %v460
    %v476 = vor.u32 %v474, %v475
    %vm477 = vcmp.lt.s32.totalorder %v458, 1
    %vm478 = vcmp.lt.s32.totalorder %v458, 2
    %vm479 = vcmp.lt.s32.totalorder %v458, 3
    %vm480 = vcmp.lt.s32.totalorder %v458, 4
    %v481 = vsel %vm477, %v461, %v464
    %v482 = vsel %vm480, %v470, 2102212464
    %v483 = vsel %vm479, %v467, %v482
    %v484 = vsel %vm478, %v481, %v483
    %v485 = vsel %vm477, %v464, %v467
    %v486 = vsel %vm480, %v473, 920167782
    %v487 = vsel %vm479, %v470, %v486
    %v488 = vsel %vm478, %v485, %v487
    %v489 = vsel %vm477, %v467, %v470
    %v490 = vsel %vm480, %v476, 1326507024
    %v491 = vsel %vm479, %v473, %v490
    %v492 = vsel %vm478, %v489, %v491
    %v493 = vshll.u32 %v453, 8
    %v494 = vmul.u32.u64.compose %v493, %v492
    %v495 = vextract.low.u32 %v494
    %v496 = vextract.high.u32 %v494
    %v497 = vmul.u32.u64.compose %v493, %v488
    %v498 = vextract.low.u32 %v497
    %v499 = vextract.high.u32 %v497
    %v500 = vmul.u32 %v493, %v484
    %v501 = vadd.s32 %v496, %v498
    %vm502 = vc.u32 %v496, %v498
    %v503 = vadd.s32 %v499, 1
    %v504 = vsel %vm502, %v503, %v499
    %v505 = vadd.s32 %v500, %v504
    %v506 = vadd.s32 %v505, 536870912
    %v507 = vshrl.u32 %v506, 30
    %v508 = vshll.u32 %v507, 30
    %v509 = vsub.s32 %v505, %v508
    %vm510 = vcmp.lt.s32.totalorder %v509, 0
    %v511 = vsub.s32 0, %v509
    %v512 = vsel %vm510, %v511, %v509
    %v513 = vclz %v512
    %v514 = vsub.s32 %v513, 2
    %vm515 = vcmp.gt.s32.totalorder 0, %v514
    %v516 = vsel %vm515, 0, %v514
    %v517 = vsub.s32 32, %v516
    %v518 = vshll.u32 %v509, %v516
    %v519 = vshrl.u32 %v501, %v517
    %v520 = vor.u32 %v518, %v519
    %v521 = vsub.s32 4294967266, %v516
    %v522 = vadd.s32 %v521, 127
    %v523 = vshll.u32 %v522, 23
    %v524 = vor.u32 4788187, %v523
    %v525 = vand.u32 2147483647, %v524
    %v527 = vcvt.s32.f32 %v520
    %v528 = vmul.f32 %v527, %v525
    %v529 = vxor.u32 %v528, 2147483648
    %v530 = vsel %vm447, %v529, %v528
    %v531 = vsub.s32 4, %v507
    %v532 = vsel %vm447, %v531, %v507
    %v533 = vsel %vm446, %v444, %v530
    %v534 = vsel %vm446, 0, %v532
    %v535 = vcosq.f32.pop %v533
    %v536 = vsinq.f32.pop %v533
    %vm537 = vweird.f32 %v444
    %v538 = vadd.s32 %v534, 3
    %v539 = vand.u32 %v538, 3
    %vm540 = vcmp.lt.s32.totalorder %v539, 2
    %vm541 = vcmp.eq.s32.totalorder %v539, 0
    %v542 = vxor.u32 %v536, 2147483648
    %v543 = vsel %vm541, %v535, %v542
    %vm544 = vcmp.eq.s32.totalorder %v539, 2
    %v545 = vxor.u32 %v535, 2147483648
    %v546 = vsel %vm544, %v545, %v536
    %v547 = vsel %vm540, %v543, %v546
    %v548 = vsel %vm537, nan, %v547
    %s549 = scalar_lea.vmem [#allocation5], 8
    %550 = vst [vmem:[%s549] sm:$0xf] %v548
    %v551 = vand.u32 2147483647, %v444
    %vm552 = vcmp.le.f32.partialorder %v551, 0.7853982
    %vm553 = vcmp.lt.s32.totalorder %v444, 0
    %v554 = vand.u32 %v444, 2139095040
    %v555 = vshrl.u32 %v554, 23
    %v556 = vsub.s32 %v555, 127
    %v557 = vand.u32 2147483647, %v444
    %v558 = vand.u32 %v557, 8388607
    %v559 = vor.u32 %v558, 8388608
    %v560 = vsub.s32 0, %v559
    %v561 = vadd.s32 %v556, 1
    %vm562 = vcmp.gt.s32.totalorder %v561, 0
    %v563 = vsel %vm562, %v561, 0
    %v564 = vshrl.u32 %v563, 5
    %v565 = vand.u32 %v563, 31
    %v566 = vsub.s32 32, %v565
    %v567 = vshrl.u32 683565275, %v566
    %v568 = vshll.u32 683565275, %v565
    %v569 = vshrl.u32 2475754826, %v566
    %v570 = vor.u32 %v568, %v569
    %v571 = vshll.u32 2475754826, %v565
    %v572 = vshrl.u32 2131351028, %v566
    %v573 = vor.u32 %v571, %v572
    %v574 = vshll.u32 2131351028, %v565
    %v575 = vshrl.u32 2102212464, %v566
    %v576 = vor.u32 %v574, %v575
    %v577 = vshll.u32 2102212464, %v565
    %v578 = vshrl.u32 920167782, %v566
    %v579 = vor.u32 %v577, %v578
    %v580 = vshll.u32 920167782, %v565
    %v581 = vshrl.u32 1326507024, %v566
    %v582 = vor.u32 %v580, %v581
    %vm583 = vcmp.lt.s32.totalorder %v564, 1
    %vm584 = vcmp.lt.s32.totalorder %v564, 2
    %vm585 = vcmp.lt.s32.totalorder %v564, 3
    %vm586 = vcmp.lt.s32.totalorder %v564, 4
    %v587 = vsel %vm583, %v567, %v570
    %v588 = vsel %vm586, %v576, 2102212464
    %v589 = vsel %vm585, %v573, %v588
    %v590 = vsel %vm584, %v587, %v589
    %v591 = vsel %vm583, %v570, %v573
    %v592 = vsel %vm586, %v579, 920167782
    %v593 = vsel %vm585, %v576, %v592
    %v594 = vsel %vm584, %v591, %v593
    %v595 = vsel %vm583, %v573, %v576
    %v596 = vsel %vm586, %v582, 1326507024
    %v597 = vsel %vm585, %v579, %v596
    %v598 = vsel %vm584, %v595, %v597
    %v599 = vshll.u32 %v559, 8
    %v600 = vmul.u32.u64.compose %v599, %v598
    %v601 = vextract.low.u32 %v600
    %v602 = vextract.high.u32 %v600
    %v603 = vmul.u32.u64.compose %v599, %v594
    %v604 = vextract.low.u32 %v603
    %v605 = vextract.high.u32 %v603
    %v606 = vmul.u32 %v599, %v590
    %v607 = vadd.s32 %v602, %v604
    %vm608 = vc.u32 %v602, %v604
    %v609 = vadd.s32 %v605, 1
    %v610 = vsel %vm608, %v609, %v605
    %v611 = vadd.s32 %v606, %v610
    %v612 = vadd.s32 %v611, 536870912
    %v613 = vshrl.u32 %v612, 30
    %v614 = vshll.u32 %v613, 30
    %v615 = vsub.s32 %v611, %v614
    %vm616 = vcmp.lt.s32.totalorder %v615, 0
    %v617 = vsub.s32 0, %v615
    %v618 = vsel %vm616, %v617, %v615
    %v619 = vclz %v618
    %v620 = vsub.s32 %v619, 2
    %vm621 = vcmp.gt.s32.totalorder 0, %v620
    %v622 = vsel %vm621, 0, %v620
    %v623 = vsub.s32 32, %v622
    %v624 = vshll.u32 %v615, %v622
    %v625 = vshrl.u32 %v607, %v623
    %v626 = vor.u32 %v624, %v625
    %v627 = vsub.s32 4294967266, %v622
    %v628 = vadd.s32 %v627, 127
    %v629 = vshll.u32 %v628, 23
    %v630 = vor.u32 4788187, %v629
    %v631 = vand.u32 2147483647, %v630
    %v633 = vcvt.s32.f32 %v626
    %v634 = vmul.f32 %v633, %v631
    %v635 = vxor.u32 %v634, 2147483648
    %v636 = vsel %vm553, %v635, %v634
    %v637 = vsub.s32 4, %v613
    %v638 = vsel %vm553, %v637, %v613
    %v639 = vsel %vm552, %v444, %v636
    %v640 = vsel %vm552, 0, %v638
    %v641 = vcosq.f32.pop %v639
    %v642 = vsinq.f32.pop %v639
    %vm643 = vweird.f32 %v444
    %v644 = vand.u32 %v640, 3
    %vm645 = vcmp.lt.s32.totalorder %v644, 2
    %vm646 = vcmp.eq.s32.totalorder %v644, 0
    %v647 = vxor.u32 %v642, 2147483648
    %v648 = vsel %vm646, %v641, %v647
    %vm649 = vcmp.eq.s32.totalorder %v644, 2
    %v650 = vxor.u32 %v641, 2147483648
    %v651 = vsel %vm649, %v650, %v642
    %v652 = vsel %vm645, %v648, %v651
    %v653 = vsel %vm643, nan, %v652
    %s654 = scalar_lea.vmem [#allocation5], 28
    %655 = vst [vmem:[%s654] sm:$0xf] %v653
    %v656 = vmul.f32 %v21, 8.0
    %v657 = vand.u32 2147483647, %v656
    %vm658 = vcmp.le.f32.partialorder %v657, 0.7853982
    %vm659 = vcmp.lt.s32.totalorder %v656, 0
    %v660 = vand.u32 %v656, 2139095040
    %v661 = vshrl.u32 %v660, 23
    %v662 = vsub.s32 %v661, 127
    %v663 = vand.u32 2147483647, %v656
    %v664 = vand.u32 %v663, 8388607
    %v665 = vor.u32 %v664, 8388608
    %v666 = vsub.s32 0, %v665
    %v667 = vadd.s32 %v662, 1
    %vm668 = vcmp.gt.s32.totalorder %v667, 0
    %v669 = vsel %vm668, %v667, 0
    %v670 = vshrl.u32 %v669, 5
    %v671 = vand.u32 %v669, 31
    %v672 = vsub.s32 32, %v671
    %v673 = vshrl.u32 683565275, %v672
    %v674 = vshll.u32 683565275, %v671
    %v675 = vshrl.u32 2475754826, %v672
    %v676 = vor.u32 %v674, %v675
    %v677 = vshll.u32 2475754826, %v671
    %v678 = vshrl.u32 2131351028, %v672
    %v679 = vor.u32 %v677, %v678
    %v680 = vshll.u32 2131351028, %v671
    %v681 = vshrl.u32 2102212464, %v672
    %v682 = vor.u32 %v680, %v681
    %v683 = vshll.u32 2102212464, %v671
    %v684 = vshrl.u32 920167782, %v672
    %v685 = vor.u32 %v683, %v684
    %v686 = vshll.u32 920167782, %v671
    %v687 = vshrl.u32 1326507024, %v672
    %v688 = vor.u32 %v686, %v687
    %vm689 = vcmp.lt.s32.totalorder %v670, 1
    %vm690 = vcmp.lt.s32.totalorder %v670, 2
    %vm691 = vcmp.lt.s32.totalorder %v670, 3
    %vm692 = vcmp.lt.s32.totalorder %v670, 4
    %v693 = vsel %vm689, %v673, %v676
    %v694 = vsel %vm692, %v682, 2102212464
    %v695 = vsel %vm691, %v679, %v694
    %v696 = vsel %vm690, %v693, %v695
    %v697 = vsel %vm689, %v676, %v679
    %v698 = vsel %vm692, %v685, 920167782
    %v699 = vsel %vm691, %v682, %v698
    %v700 = vsel %vm690, %v697, %v699
    %v701 = vsel %vm689, %v679, %v682
    %v702 = vsel %vm692, %v688, 1326507024
    %v703 = vsel %vm691, %v685, %v702
    %v704 = vsel %vm690, %v701, %v703
    %v705 = vshll.u32 %v665, 8
    %v706 = vmul.u32.u64.compose %v705, %v704
    %v707 = vextract.low.u32 %v706
    %v708 = vextract.high.u32 %v706
    %v709 = vmul.u32.u64.compose %v705, %v700
    %v710 = vextract.low.u32 %v709
    %v711 = vextract.high.u32 %v709
    %v712 = vmul.u32 %v705, %v696
    %v713 = vadd.s32 %v708, %v710
    %vm714 = vc.u32 %v708, %v710
    %v715 = vadd.s32 %v711, 1
    %v716 = vsel %vm714, %v715, %v711
    %v717 = vadd.s32 %v712, %v716
    %v718 = vadd.s32 %v717, 536870912
    %v719 = vshrl.u32 %v718, 30
    %v720 = vshll.u32 %v719, 30
    %v721 = vsub.s32 %v717, %v720
    %vm722 = vcmp.lt.s32.totalorder %v721, 0
    %v723 = vsub.s32 0, %v721
    %v724 = vsel %vm722, %v723, %v721
    %v725 = vclz %v724
    %v726 = vsub.s32 %v725, 2
    %vm727 = vcmp.gt.s32.totalorder 0, %v726
    %v728 = vsel %vm727, 0, %v726
    %v729 = vsub.s32 32, %v728
    %v730 = vshll.u32 %v721, %v728
    %v731 = vshrl.u32 %v713, %v729
    %v732 = vor.u32 %v730, %v731
    %v733 = vsub.s32 4294967266, %v728
    %v734 = vadd.s32 %v733, 127
    %v735 = vshll.u32 %v734, 23
    %v736 = vor.u32 4788187, %v735
    %v737 = vand.u32 2147483647, %v736
    %v739 = vcvt.s32.f32 %v732
    %v740 = vmul.f32 %v739, %v737
    %v741 = vxor.u32 %v740, 2147483648
    %v742 = vsel %vm659, %v741, %v740
    %v743 = vsub.s32 4, %v719
    %v744 = vsel %vm659, %v743, %v719
    %v745 = vsel %vm658, %v656, %v742
    %v746 = vsel %vm658, 0, %v744
    %v747 = vcosq.f32.pop %v745
    %v748 = vsinq.f32.pop %v745
    %vm749 = vweird.f32 %v656
    %v750 = vadd.s32 %v746, 3
    %v751 = vand.u32 %v750, 3
    %vm752 = vcmp.lt.s32.totalorder %v751, 2
    %vm753 = vcmp.eq.s32.totalorder %v751, 0
    %v754 = vxor.u32 %v748, 2147483648
    %v755 = vsel %vm753, %v747, %v754
    %vm756 = vcmp.eq.s32.totalorder %v751, 2
    %v757 = vxor.u32 %v747, 2147483648
    %v758 = vsel %vm756, %v757, %v748
    %v759 = vsel %vm752, %v755, %v758
    %v760 = vsel %vm749, nan, %v759
    %s761 = scalar_lea.vmem [#allocation5], 12
    %762 = vst [vmem:[%s761] sm:$0xf] %v760
    %v763 = vand.u32 2147483647, %v656
    %vm764 = vcmp.le.f32.partialorder %v763, 0.7853982
    %vm765 = vcmp.lt.s32.totalorder %v656, 0
    %v766 = vand.u32 %v656, 2139095040
    %v767 = vshrl.u32 %v766, 23
    %v768 = vsub.s32 %v767, 127
    %v769 = vand.u32 2147483647, %v656
    %v770 = vand.u32 %v769, 8388607
    %v771 = vor.u32 %v770, 8388608
    %v772 = vsub.s32 0, %v771
    %v773 = vadd.s32 %v768, 1
    %vm774 = vcmp.gt.s32.totalorder %v773, 0
    %v775 = vsel %vm774, %v773, 0
    %v776 = vshrl.u32 %v775, 5
    %v777 = vand.u32 %v775, 31
    %v778 = vsub.s32 32, %v777
    %v779 = vshrl.u32 683565275, %v778
    %v780 = vshll.u32 683565275, %v777
    %v781 = vshrl.u32 2475754826, %v778
    %v782 = vor.u32 %v780, %v781
    %v783 = vshll.u32 2475754826, %v777
    %v784 = vshrl.u32 2131351028, %v778
    %v785 = vor.u32 %v783, %v784
    %v786 = vshll.u32 2131351028, %v777
    %v787 = vshrl.u32 2102212464, %v778
    %v788 = vor.u32 %v786, %v787
    %v789 = vshll.u32 2102212464, %v777
    %v790 = vshrl.u32 920167782, %v778
    %v791 = vor.u32 %v789, %v790
    %v792 = vshll.u32 920167782, %v777
    %v793 = vshrl.u32 1326507024, %v778
    %v794 = vor.u32 %v792, %v793
    %vm795 = vcmp.lt.s32.totalorder %v776, 1
    %vm796 = vcmp.lt.s32.totalorder %v776, 2
    %vm797 = vcmp.lt.s32.totalorder %v776, 3
    %vm798 = vcmp.lt.s32.totalorder %v776, 4
    %v799 = vsel %vm795, %v779, %v782
    %v800 = vsel %vm798, %v788, 2102212464
    %v801 = vsel %vm797, %v785, %v800
    %v802 = vsel %vm796, %v799, %v801
    %v803 = vsel %vm795, %v782, %v785
    %v804 = vsel %vm798, %v791, 920167782
    %v805 = vsel %vm797, %v788, %v804
    %v806 = vsel %vm796, %v803, %v805
    %v807 = vsel %vm795, %v785, %v788
    %v808 = vsel %vm798, %v794, 1326507024
    %v809 = vsel %vm797, %v791, %v808
    %v810 = vsel %vm796, %v807, %v809
    %v811 = vshll.u32 %v771, 8
    %v812 = vmul.u32.u64.compose %v811, %v810
    %v813 = vextract.low.u32 %v812
    %v814 = vextract.high.u32 %v812
    %v815 = vmul.u32.u64.compose %v811, %v806
    %v816 = vextract.low.u32 %v815
    %v817 = vextract.high.u32 %v815
    %v818 = vmul.u32 %v811, %v802
    %v819 = vadd.s32 %v814, %v816
    %vm820 = vc.u32 %v814, %v816
    %v821 = vadd.s32 %v817, 1
    %v822 = vsel %vm820, %v821, %v817
    %v823 = vadd.s32 %v818, %v822
    %v824 = vadd.s32 %v823, 536870912
    %v825 = vshrl.u32 %v824, 30
    %v826 = vshll.u32 %v825, 30
    %v827 = vsub.s32 %v823, %v826
    %vm828 = vcmp.lt.s32.totalorder %v827, 0
    %v829 = vsub.s32 0, %v827
    %v830 = vsel %vm828, %v829, %v827
    %v831 = vclz %v830
    %v832 = vsub.s32 %v831, 2
    %vm833 = vcmp.gt.s32.totalorder 0, %v832
    %v834 = vsel %vm833, 0, %v832
    %v835 = vsub.s32 32, %v834
    %v836 = vshll.u32 %v827, %v834
    %v837 = vshrl.u32 %v819, %v835
    %v838 = vor.u32 %v836, %v837
    %v839 = vsub.s32 4294967266, %v834
    %v840 = vadd.s32 %v839, 127
    %v841 = vshll.u32 %v840, 23
    %v842 = vor.u32 4788187, %v841
    %v843 = vand.u32 2147483647, %v842
    %v845 = vcvt.s32.f32 %v838
    %v846 = vmul.f32 %v845, %v843
    %v847 = vxor.u32 %v846, 2147483648
    %v848 = vsel %vm765, %v847, %v846
    %v849 = vsub.s32 4, %v825
    %v850 = vsel %vm765, %v849, %v825
    %v851 = vsel %vm764, %v656, %v848
    %v852 = vsel %vm764, 0, %v850
    %v853 = vcosq.f32.pop %v851
    %v854 = vsinq.f32.pop %v851
    %vm855 = vweird.f32 %v656
    %v856 = vand.u32 %v852, 3
    %vm857 = vcmp.lt.s32.totalorder %v856, 2
    %vm858 = vcmp.eq.s32.totalorder %v856, 0
    %v859 = vxor.u32 %v854, 2147483648
    %v860 = vsel %vm858, %v853, %v859
    %vm861 = vcmp.eq.s32.totalorder %v856, 2
    %v862 = vxor.u32 %v853, 2147483648
    %v863 = vsel %vm861, %v862, %v854
    %v864 = vsel %vm857, %v860, %v863
    %v865 = vsel %vm855, nan, %v864
    %s866 = scalar_lea.vmem [#allocation5], 32
    %867 = vst [vmem:[%s866] sm:$0xf] %v865
    %v868 = vmul.f32 %v21, 16.0
    %v869 = vand.u32 2147483647, %v868
    %vm870 = vcmp.le.f32.partialorder %v869, 0.7853982
    %vm871 = vcmp.lt.s32.totalorder %v868, 0
    %v872 = vand.u32 %v868, 2139095040
    %v873 = vshrl.u32 %v872, 23
    %v874 = vsub.s32 %v873, 127
    %v875 = vand.u32 2147483647, %v868
    %v876 = vand.u32 %v875, 8388607
    %v877 = vor.u32 %v876, 8388608
    %v878 = vsub.s32 0, %v877
    %v879 = vadd.s32 %v874, 1
    %vm880 = vcmp.gt.s32.totalorder %v879, 0
    %v881 = vsel %vm880, %v879, 0
    %v882 = vshrl.u32 %v881, 5
    %v883 = vand.u32 %v881, 31
    %v884 = vsub.s32 32, %v883
    %v885 = vshrl.u32 683565275, %v884
    %v886 = vshll.u32 683565275, %v883
    %v887 = vshrl.u32 2475754826, %v884
    %v888 = vor.u32 %v886, %v887
    %v889 = vshll.u32 2475754826, %v883
    %v890 = vshrl.u32 2131351028, %v884
    %v891 = vor.u32 %v889, %v890
    %v892 = vshll.u32 2131351028, %v883
    %v893 = vshrl.u32 2102212464, %v884
    %v894 = vor.u32 %v892, %v893
    %v895 = vshll.u32 2102212464, %v883
    %v896 = vshrl.u32 920167782, %v884
    %v897 = vor.u32 %v895, %v896
    %v898 = vshll.u32 920167782, %v883
    %v899 = vshrl.u32 1326507024, %v884
    %v900 = vor.u32 %v898, %v899
    %vm901 = vcmp.lt.s32.totalorder %v882, 1
    %vm902 = vcmp.lt.s32.totalorder %v882, 2
    %vm903 = vcmp.lt.s32.totalorder %v882, 3
    %vm904 = vcmp.lt.s32.totalorder %v882, 4
    %v905 = vsel %vm901, %v885, %v888
    %v906 = vsel %vm904, %v894, 2102212464
    %v907 = vsel %vm903, %v891, %v906
    %v908 = vsel %vm902, %v905, %v907
    %v909 = vsel %vm901, %v888, %v891
    %v910 = vsel %vm904, %v897, 920167782
    %v911 = vsel %vm903, %v894, %v910
    %v912 = vsel %vm902, %v909, %v911
    %v913 = vsel %vm901, %v891, %v894
    %v914 = vsel %vm904, %v900, 1326507024
    %v915 = vsel %vm903, %v897, %v914
    %v916 = vsel %vm902, %v913, %v915
    %v917 = vshll.u32 %v877, 8
    %v918 = vmul.u32.u64.compose %v917, %v916
    %v919 = vextract.low.u32 %v918
    %v920 = vextract.high.u32 %v918
    %v921 = vmul.u32.u64.compose %v917, %v912
    %v922 = vextract.low.u32 %v921
    %v923 = vextract.high.u32 %v921
    %v924 = vmul.u32 %v917, %v908
    %v925 = vadd.s32 %v920, %v922
    %vm926 = vc.u32 %v920, %v922
    %v927 = vadd.s32 %v923, 1
    %v928 = vsel %vm926, %v927, %v923
    %v929 = vadd.s32 %v924, %v928
    %v930 = vadd.s32 %v929, 536870912
    %v931 = vshrl.u32 %v930, 30
    %v932 = vshll.u32 %v931, 30
    %v933 = vsub.s32 %v929, %v932
    %vm934 = vcmp.lt.s32.totalorder %v933, 0
    %v935 = vsub.s32 0, %v933
    %v936 = vsel %vm934, %v935, %v933
    %v937 = vclz %v936
    %v938 = vsub.s32 %v937, 2
    %vm939 = vcmp.gt.s32.totalorder 0, %v938
    %v940 = vsel %vm939, 0, %v938
    %v941 = vsub.s32 32, %v940
    %v942 = vshll.u32 %v933, %v940
    %v943 = vshrl.u32 %v925, %v941
    %v944 = vor.u32 %v942, %v943
    %v945 = vsub.s32 4294967266, %v940
    %v946 = vadd.s32 %v945, 127
    %v947 = vshll.u32 %v946, 23
    %v948 = vor.u32 4788187, %v947
    %v949 = vand.u32 2147483647, %v948
    %v951 = vcvt.s32.f32 %v944
    %v952 = vmul.f32 %v951, %v949
    %v953 = vxor.u32 %v952, 2147483648
    %v954 = vsel %vm871, %v953, %v952
    %v955 = vsub.s32 4, %v931
    %v956 = vsel %vm871, %v955, %v931
    %v957 = vsel %vm870, %v868, %v954
    %v958 = vsel %vm870, 0, %v956
    %v959 = vcosq.f32.pop %v957
    %v960 = vsinq.f32.pop %v957
    %vm961 = vweird.f32 %v868
    %v962 = vadd.s32 %v958, 3
    %v963 = vand.u32 %v962, 3
    %vm964 = vcmp.lt.s32.totalorder %v963, 2
    %vm965 = vcmp.eq.s32.totalorder %v963, 0
    %v966 = vxor.u32 %v960, 2147483648
    %v967 = vsel %vm965, %v959, %v966
    %vm968 = vcmp.eq.s32.totalorder %v963, 2
    %v969 = vxor.u32 %v959, 2147483648
    %v970 = vsel %vm968, %v969, %v960
    %v971 = vsel %vm964, %v967, %v970
    %v972 = vsel %vm961, nan, %v971
    %s973 = scalar_lea.vmem [#allocation5], 16
    %974 = vst [vmem:[%s973] sm:$0xf] %v972
    %v975 = vand.u32 2147483647, %v868
    %vm976 = vcmp.le.f32.partialorder %v975, 0.7853982
    %vm977 = vcmp.lt.s32.totalorder %v868, 0
    %v978 = vand.u32 %v868, 2139095040
    %v979 = vshrl.u32 %v978, 23
    %v980 = vsub.s32 %v979, 127
    %v981 = vand.u32 2147483647, %v868
    %v982 = vand.u32 %v981, 8388607
    %v983 = vor.u32 %v982, 8388608
    %v984 = vsub.s32 0, %v983
    %v985 = vadd.s32 %v980, 1
    %vm986 = vcmp.gt.s32.totalorder %v985, 0
    %v987 = vsel %vm986, %v985, 0
    %v988 = vshrl.u32 %v987, 5
    %v989 = vand.u32 %v987, 31
    %v990 = vsub.s32 32, %v989
    %v991 = vshrl.u32 683565275, %v990
    %v992 = vshll.u32 683565275, %v989
    %v993 = vshrl.u32 2475754826, %v990
    %v994 = vor.u32 %v992, %v993
    %v995 = vshll.u32 2475754826, %v989
    %v996 = vshrl.u32 2131351028, %v990
    %v997 = vor.u32 %v995, %v996
    %v998 = vshll.u32 2131351028, %v989
    %v999 = vshrl.u32 2102212464, %v990
    %v1000 = vor.u32 %v998, %v999
    %v1001 = vshll.u32 2102212464, %v989
    %v1002 = vshrl.u32 920167782, %v990
    %v1003 = vor.u32 %v1001, %v1002
    %v1004 = vshll.u32 920167782, %v989
    %v1005 = vshrl.u32 1326507024, %v990
    %v1006 = vor.u32 %v1004, %v1005
    %vm1007 = vcmp.lt.s32.totalorder %v988, 1
    %vm1008 = vcmp.lt.s32.totalorder %v988, 2
    %vm1009 = vcmp.lt.s32.totalorder %v988, 3
    %vm1010 = vcmp.lt.s32.totalorder %v988, 4
    %v1011 = vsel %vm1007, %v991, %v994
    %v1012 = vsel %vm1010, %v1000, 2102212464
    %v1013 = vsel %vm1009, %v997, %v1012
    %v1014 = vsel %vm1008, %v1011, %v1013
    %v1015 = vsel %vm1007, %v994, %v997
    %v1016 = vsel %vm1010, %v1003, 920167782
    %v1017 = vsel %vm1009, %v1000, %v1016
    %v1018 = vsel %vm1008, %v1015, %v1017
    %v1019 = vsel %vm1007, %v997, %v1000
    %v1020 = vsel %vm1010, %v1006, 1326507024
    %v1021 = vsel %vm1009, %v1003, %v1020
    %v1022 = vsel %vm1008, %v1019, %v1021
    %v1023 = vshll.u32 %v983, 8
    %v1024 = vmul.u32.u64.compose %v1023, %v1022
    %v1025 = vextract.low.u32 %v1024
    %v1026 = vextract.high.u32 %v1024
    %v1027 = vmul.u32.u64.compose %v1023, %v1018
    %v1028 = vextract.low.u32 %v1027
    %v1029 = vextract.high.u32 %v1027
    %v1030 = vmul.u32 %v1023, %v1014
    %v1031 = vadd.s32 %v1026, %v1028
    %vm1032 = vc.u32 %v1026, %v1028
    %v1033 = vadd.s32 %v1029, 1
    %v1034 = vsel %vm1032, %v1033, %v1029
    %v1035 = vadd.s32 %v1030, %v1034
    %v1036 = vadd.s32 %v1035, 536870912
    %v1037 = vshrl.u32 %v1036, 30
    %v1038 = vshll.u32 %v1037, 30
    %v1039 = vsub.s32 %v1035, %v1038
    %vm1040 = vcmp.lt.s32.totalorder %v1039, 0
    %v1041 = vsub.s32 0, %v1039
    %v1042 = vsel %vm1040, %v1041, %v1039
    %v1043 = vclz %v1042
    %v1044 = vsub.s32 %v1043, 2
    %vm1045 = vcmp.gt.s32.totalorder 0, %v1044
    %v1046 = vsel %vm1045, 0, %v1044
    %v1047 = vsub.s32 32, %v1046
    %v1048 = vshll.u32 %v1039, %v1046
    %v1049 = vshrl.u32 %v1031, %v1047
    %v1050 = vor.u32 %v1048, %v1049
    %v1051 = vsub.s32 4294967266, %v1046
    %v1052 = vadd.s32 %v1051, 127
    %v1053 = vshll.u32 %v1052, 23
    %v1054 = vor.u32 4788187, %v1053
    %v1055 = vand.u32 2147483647, %v1054
    %v1057 = vcvt.s32.f32 %v1050
    %v1058 = vmul.f32 %v1057, %v1055
    %v1059 = vxor.u32 %v1058, 2147483648
    %v1060 = vsel %vm977, %v1059, %v1058
    %v1061 = vsub.s32 4, %v1037
    %v1062 = vsel %vm977, %v1061, %v1037
    %v1063 = vsel %vm976, %v868, %v1060
    %v1064 = vsel %vm976, 0, %v1062
    %v1065 = vcosq.f32.pop %v1063
    %v1066 = vsinq.f32.pop %v1063
    %vm1067 = vweird.f32 %v868
    %v1068 = vand.u32 %v1064, 3
    %vm1069 = vcmp.lt.s32.totalorder %v1068, 2
    %vm1070 = vcmp.eq.s32.totalorder %v1068, 0
    %v1071 = vxor.u32 %v1066, 2147483648
    %v1072 = vsel %vm1070, %v1065, %v1071
    %vm1073 = vcmp.eq.s32.totalorder %v1068, 2
    %v1074 = vxor.u32 %v1065, 2147483648
    %v1075 = vsel %vm1073, %v1074, %v1066
    %v1076 = vsel %vm1069, %v1072, %v1075
    %v1077 = vsel %vm1067, nan, %v1076
    %s1078 = scalar_lea.vmem [#allocation5], 36
    %1079 = vst [vmem:[%s1078] sm:$0xf] %v1077
    %s1080 = scalar_lea.vmem [#allocation5], 40
    %1081 = vst [vmem:[%s1080] sm:$0xf] %v21
    // Predicated region
    $region10: #{tpu_custom_call.1} parent=1 // pred_check
      _
    $region11: #{tpu_custom_call.1} parent=1 // pred_check_branch
      %1083 = sbr.rel (0) target = $region13
    $region12: #{tpu_custom_call.1} parent=1 // pred_region
      %s1085 = ssub.s32 704, 704
      %1086 = vsyncadd [#allocation4], %s1085
      %s1087 = sshll.u32 [#allocation5], 4
      %s1088 = int_to_ptr.vmem [resolvable:$true] %s1087
      %1093 = dma.vmem_to_hbm [thread:$0]  %s1088, 704, %s1, [#allocation4], 64, 64, 4
    $region13: #{tpu_custom_call.1} parent=1 // pred_fallthru
      _
    // Predicated region
    $region14: #{tpu_custom_call.1} parent=1 // pred_check
      _
    $region15: #{tpu_custom_call.1} parent=1 // pred_check_branch
      %1095 = sbr.rel (0) target = $region17
    $region16: #{tpu_custom_call.1} parent=1 // pred_region
      %1096 = dma.done [#allocation4], 704
    $region17: #{tpu_custom_call.1} parent=1 // pred_fallthru
      _
    %1097 = vsyncpa [#allocation3], 1
    %1098 = vsyncpa [#allocation4], 1

</llo_original>
